<compile_context>
chip_gen: v6e
topology: v6e:2x2x1
jax: 0.10.0
libtpu: 0.0.40
codegen_flags: <defaults>
</compile_context>

<pallas_src>
import jax
import jax.numpy as jnp
from jax.experimental import pallas as pl
from jax.experimental.pallas import tpu as pltpu


def mlp_kernel(x_ref,
               w1_ref, b1_ref,
               w2_ref, b2_ref,
               w3_ref, b3_ref,
               w4_ref, b4_ref,
               o_ref):
    """Full 4-layer MLP forward for one TB-row batch tile.

    Matmul operands in the weights' compute dtype (bf16); accumulation, bias
    add and ReLU in f32.
    """
    # Cast the f32 input tile to the matmul compute dtype in-kernel.
    h = x_ref[...].astype(w1_ref.dtype)

    h = jnp.dot(h, w1_ref[...], preferred_element_type=jnp.float32) + b1_ref[...]
    h = jnp.maximum(h, 0.0).astype(w2_ref.dtype)

    h = jnp.dot(h, w2_ref[...], preferred_element_type=jnp.float32) + b2_ref[...]
    h = jnp.maximum(h, 0.0).astype(w3_ref.dtype)

    h = jnp.dot(h, w3_ref[...], preferred_element_type=jnp.float32) + b3_ref[...]
    h = jnp.maximum(h, 0.0).astype(w4_ref.dtype)

    h = jnp.dot(h, w4_ref[...], preferred_element_type=jnp.float32) + b4_ref[...]

    o_ref[...] = h.astype(o_ref.dtype)


def lower_vector_forward(x, params, *, tb=128, compute_dtype=jnp.bfloat16):
    """x: (B, 64) float32 -> logits: (B, 10) float32."""
    (w1, b1), (w2, b2), (w3, b3), (w4, b4) = params
    B = x.shape[0]
    in_dim = x.shape[1]
    out_true = w4.shape[1]          # 10
    out_pad = 128                   # lane-dense padded width of the last layer

    # Lane-pad the last layer (extra zero columns never touch the first 10 outputs).
    w4p = jnp.zeros((w4.shape[0], out_pad), w4.dtype).at[:, :out_true].set(w4)
    b4p = jnp.zeros((1, out_pad), b4.dtype).at[:, :out_true].set(b4)

    # Weights in compute dtype (tiny, one-time cast); biases stay f32 and are
    # added directly to the f32 accumulator.
    w1c = w1.astype(compute_dtype)
    w2c = w2.astype(compute_dtype)
    w3c = w3.astype(compute_dtype)
    w4c = w4p.astype(compute_dtype)

    # Clamp the row tile to the (8-aligned) batch so tiny batches don't pad to
    # a full 128-row tile, then pad the batch to a whole number of tiles.
    tb_eff = min(tb, max(8, ((B + 7) // 8) * 8))
    Bp = ((B + tb_eff - 1) // tb_eff) * tb_eff
    xk = x if Bp == B else jnp.pad(x, ((0, Bp - B), (0, 0)))

    grid = (Bp // tb_eff,)

    def resident(a):
        # Same block every grid step -> stays resident in VMEM across iterations.
        return pl.BlockSpec(a.shape, lambda i: (0, 0))

    in_specs = [
        pl.BlockSpec((tb_eff, in_dim), lambda i: (i, 0)),   # x tile, pipelined
        resident(w1c), resident(b1),
        resident(w2c), resident(b2),
        resident(w3c), resident(b3),
        resident(w4c), resident(b4p),
    ]

    flops = 2 * Bp * (64 * 128 + 128 * 256 + 256 * 64 + 64 * out_pad)
    weight_bytes = sum(int(a.size) * a.dtype.itemsize
                       for a in (w1c, b1, w2c, b2, w3c, b3, w4c, b4p))
    bytes_accessed = Bp * (in_dim * xk.dtype.itemsize + out_pad * 4) + weight_bytes

    out = pl.pallas_call(
        mlp_kernel,
        out_shape=jax.ShapeDtypeStruct((Bp, out_pad), jnp.float32),
        grid=grid,
        in_specs=in_specs,
        out_specs=pl.BlockSpec((tb_eff, out_pad), lambda i: (i, 0)),
        compiler_params=pltpu.CompilerParams(
            dimension_semantics=("parallel",)),   # v7x: shard batch tiles over 2 TCs
        cost_estimate=pl.CostEstimate(
            flops=flops, transcendentals=0, bytes_accessed=bytes_accessed),
    )(xk, w1c, b1, w2c, b2, w3c, b3, w4c, b4p)

    return out[:B, :out_true]


def init_params(key):
    """nn.Linear-style init. PyTorch stores W as (out, in); we build (in, out)
    directly so the kernel computes y = x @ W + b. Biases are (1, out) rows."""
    dims = [(64, 128), (128, 256), (256, 64), (64, 10)]
    params = []
    for fan_in, fan_out in dims:
        kw, kb, key = jax.random.split(key, 3)
        bound = 1.0 / jnp.sqrt(fan_in)
        w = jax.random.uniform(kw, (fan_in, fan_out), jnp.float32, -bound, bound)
        b = jax.random.uniform(kb, (1, fan_out), jnp.float32, -bound, bound)
        params.append((w, b))
    return params


def reference_forward(x, params, compute_dtype=jnp.bfloat16):
    """Pure-JAX reference using the identical bf16-operand / f32-accumulate recipe."""
    h = x.astype(compute_dtype)
    for i, (w, b) in enumerate(params):
        h = jnp.dot(h, w.astype(compute_dtype),
                    preferred_element_type=jnp.float32) + b
        if i < len(params) - 1:
            h = jnp.maximum(h, 0.0).astype(compute_dtype)
    return h


if __name__ == "__main__":
    key = jax.random.PRNGKey(0)
    k_x, k_p = jax.random.split(key)

    batch = 8
    x = jax.random.normal(k_x, (batch, 64), jnp.float32)
    params = init_params(k_p)

    out = lower_vector_forward(x, params)
    out = jax.block_until_ready(out)

    ref = reference_forward(x, params)
    assert out.shape == (batch, 10), out.shape
    # bf16 matmul operands with f32 accumulation -> relaxed tolerance vs pure f32.
    assert jnp.allclose(out, ref, atol=1e-2, rtol=1e-2), "mismatch vs reference"

    print("KERNEL_OK")
</pallas_src>

<mosaic_0001>
module attributes {stable_mosaic.version = 11 : i64} {
  func.func @mlp_kernel(%arg0: i32, %arg1: memref<8x64xf32, #tpu.memory_space<vmem>>, %arg2: memref<64x128xbf16, #tpu.memory_space<vmem>>, %arg3: memref<1x128xf32, #tpu.memory_space<vmem>>, %arg4: memref<128x256xbf16, #tpu.memory_space<vmem>>, %arg5: memref<1x256xf32, #tpu.memory_space<vmem>>, %arg6: memref<256x64xbf16, #tpu.memory_space<vmem>>, %arg7: memref<1x64xf32, #tpu.memory_space<vmem>>, %arg8: memref<64x128xbf16, #tpu.memory_space<vmem>>, %arg9: memref<1x128xf32, #tpu.memory_space<vmem>>, %arg10: memref<8x128xf32, #tpu.memory_space<vmem>>) attributes {dimension_semantics = [#tpu.dimension_semantics<parallel>], iteration_bounds = array<i64: 1>, scalar_prefetch = 0 : i64, scratch_operands = 0 : i64, tpu.core_type = #tpu.core_type<tc>, window_params = [{transform_indices = @transform_0, window_bounds = array<i64: 8, 64>}, {pipeline_mode = #tpu.pipeline_mode<synchronous>, transform_indices = @transform_1, window_bounds = array<i64: 64, 128>}, {pipeline_mode = #tpu.pipeline_mode<synchronous>, transform_indices = @transform_2, window_bounds = array<i64: 1, 128>}, {pipeline_mode = #tpu.pipeline_mode<synchronous>, transform_indices = @transform_3, window_bounds = array<i64: 128, 256>}, {pipeline_mode = #tpu.pipeline_mode<synchronous>, transform_indices = @transform_4, window_bounds = array<i64: 1, 256>}, {pipeline_mode = #tpu.pipeline_mode<synchronous>, transform_indices = @transform_5, window_bounds = array<i64: 256, 64>}, {pipeline_mode = #tpu.pipeline_mode<synchronous>, transform_indices = @transform_6, window_bounds = array<i64: 1, 64>}, {pipeline_mode = #tpu.pipeline_mode<synchronous>, transform_indices = @transform_7, window_bounds = array<i64: 64, 128>}, {pipeline_mode = #tpu.pipeline_mode<synchronous>, transform_indices = @transform_8, window_bounds = array<i64: 1, 128>}, {transform_indices = @transform_9, window_bounds = array<i64: 8, 128>}]} {
    %c0 = arith.constant 0 : index
    %c0_0 = arith.constant 0 : index
    %0 = vector.load %arg1[%c0, %c0_0] : memref<8x64xf32, #tpu.memory_space<vmem>>, vector<8x64xf32>
    %1 = arith.truncf %0 : vector<8x64xf32> to vector<8x64xbf16>
    %c0_1 = arith.constant 0 : index
    %c0_2 = arith.constant 0 : index
    %2 = vector.load %arg2[%c0_1, %c0_2] : memref<64x128xbf16, #tpu.memory_space<vmem>>, vector<64x128xbf16>
    %cst = arith.constant dense<0.000000e+00> : vector<8x128xf32>
    %3 = tpu.matmul %1, %2, %cst {dimension_numbers = #tpu.dot_dimension_numbers<[1], [0], [0], [1], [0, 0, 1, 1], [], []>} : vector<8x64xbf16>, vector<64x128xbf16>, vector<8x128xf32> -> vector<8x128xf32>
    %c0_3 = arith.constant 0 : index
    %c0_4 = arith.constant 0 : index
    %4 = vector.load %arg3[%c0_3, %c0_4] : memref<1x128xf32, #tpu.memory_space<vmem>>, vector<1x128xf32>
    %5 = vector.broadcast %4 : vector<1x128xf32> to vector<8x128xf32>
    %6 = arith.addf %3, %5 : vector<8x128xf32>
    %cst_5 = arith.constant 0.000000e+00 : f32
    %7 = vector.broadcast %cst_5 : f32 to vector<8x128xf32>
    %8 = arith.maximumf %6, %7 : vector<8x128xf32>
    %9 = arith.truncf %8 : vector<8x128xf32> to vector<8x128xbf16>
    %c0_6 = arith.constant 0 : index
    %c0_7 = arith.constant 0 : index
    %10 = vector.load %arg4[%c0_6, %c0_7] : memref<128x256xbf16, #tpu.memory_space<vmem>>, vector<128x256xbf16>
    %cst_8 = arith.constant dense<0.000000e+00> : vector<8x256xf32>
    %11 = tpu.matmul %9, %10, %cst_8 {dimension_numbers = #tpu.dot_dimension_numbers<[1], [0], [0], [1], [0, 0, 1, 1], [], []>} : vector<8x128xbf16>, vector<128x256xbf16>, vector<8x256xf32> -> vector<8x256xf32>
    %c0_9 = arith.constant 0 : index
    %c0_10 = arith.constant 0 : index
    %12 = vector.load %arg5[%c0_9, %c0_10] : memref<1x256xf32, #tpu.memory_space<vmem>>, vector<1x256xf32>
    %13 = vector.broadcast %12 : vector<1x256xf32> to vector<8x256xf32>
    %14 = arith.addf %11, %13 : vector<8x256xf32>
    %cst_11 = arith.constant 0.000000e+00 : f32
    %15 = vector.broadcast %cst_11 : f32 to vector<8x256xf32>
    %16 = arith.maximumf %14, %15 : vector<8x256xf32>
    %17 = arith.truncf %16 : vector<8x256xf32> to vector<8x256xbf16>
    %c0_12 = arith.constant 0 : index
    %c0_13 = arith.constant 0 : index
    %18 = vector.load %arg6[%c0_12, %c0_13] : memref<256x64xbf16, #tpu.memory_space<vmem>>, vector<256x64xbf16>
    %cst_14 = arith.constant dense<0.000000e+00> : vector<8x64xf32>
    %19 = tpu.matmul %17, %18, %cst_14 {dimension_numbers = #tpu.dot_dimension_numbers<[1], [0], [0], [1], [0, 0, 1, 1], [], []>} : vector<8x256xbf16>, vector<256x64xbf16>, vector<8x64xf32> -> vector<8x64xf32>
    %c0_15 = arith.constant 0 : index
    %c0_16 = arith.constant 0 : index
    %20 = vector.load %arg7[%c0_15, %c0_16] : memref<1x64xf32, #tpu.memory_space<vmem>>, vector<1x64xf32>
    %21 = vector.broadcast %20 : vector<1x64xf32> to vector<8x64xf32>
    %22 = arith.addf %19, %21 : vector<8x64xf32>
    %cst_17 = arith.constant 0.000000e+00 : f32
    %23 = vector.broadcast %cst_17 : f32 to vector<8x64xf32>
    %24 = arith.maximumf %22, %23 : vector<8x64xf32>
    %25 = arith.truncf %24 : vector<8x64xf32> to vector<8x64xbf16>
    %c0_18 = arith.constant 0 : index
    %c0_19 = arith.constant 0 : index
    %26 = vector.load %arg8[%c0_18, %c0_19] : memref<64x128xbf16, #tpu.memory_space<vmem>>, vector<64x128xbf16>
    %cst_20 = arith.constant dense<0.000000e+00> : vector<8x128xf32>
    %27 = tpu.matmul %25, %26, %cst_20 {dimension_numbers = #tpu.dot_dimension_numbers<[1], [0], [0], [1], [0, 0, 1, 1], [], []>} : vector<8x64xbf16>, vector<64x128xbf16>, vector<8x128xf32> -> vector<8x128xf32>
    %c0_21 = arith.constant 0 : index
    %c0_22 = arith.constant 0 : index
    %28 = vector.load %arg9[%c0_21, %c0_22] : memref<1x128xf32, #tpu.memory_space<vmem>>, vector<1x128xf32>
    %29 = vector.broadcast %28 : vector<1x128xf32> to vector<8x128xf32>
    %30 = arith.addf %27, %29 : vector<8x128xf32>
    %c0_23 = arith.constant 0 : index
    %c0_24 = arith.constant 0 : index
    %31 = vector.load %arg10[%c0_23, %c0_24] : memref<8x128xf32, #tpu.memory_space<vmem>>, vector<8x128xf32>
    tpu.vector_store %arg10[%c0_23, %c0_24], %30 {strides = array<i32>} : memref<8x128xf32, #tpu.memory_space<vmem>>, vector<8x128xf32>,
    return
  }
  func.func @transform_0(%arg0: i32) -> (i32, i32) {
    %c0_i32 = arith.constant 0 : i32
    %c0_i32_0 = arith.constant 0 : i32
    return %arg0, %c0_i32 : i32, i32
  }
  func.func @transform_1(%arg0: i32) -> (i32, i32) {
    %c0_i32 = arith.constant 0 : i32
    %c0_i32_0 = arith.constant 0 : i32
    %c0_i32_1 = arith.constant 0 : i32
    return %c0_i32, %c0_i32_0 : i32, i32
  }
  func.func @transform_2(%arg0: i32) -> (i32, i32) {
    %c0_i32 = arith.constant 0 : i32
    %c0_i32_0 = arith.constant 0 : i32
    %c0_i32_1 = arith.constant 0 : i32
    return %c0_i32, %c0_i32_0 : i32, i32
  }
  func.func @transform_3(%arg0: i32) -> (i32, i32) {
    %c0_i32 = arith.constant 0 : i32
    %c0_i32_0 = arith.constant 0 : i32
    %c0_i32_1 = arith.constant 0 : i32
    return %c0_i32, %c0_i32_0 : i32, i32
  }
  func.func @transform_4(%arg0: i32) -> (i32, i32) {
    %c0_i32 = arith.constant 0 : i32
    %c0_i32_0 = arith.constant 0 : i32
    %c0_i32_1 = arith.constant 0 : i32
    return %c0_i32, %c0_i32_0 : i32, i32
  }
  func.func @transform_5(%arg0: i32) -> (i32, i32) {
    %c0_i32 = arith.constant 0 : i32
    %c0_i32_0 = arith.constant 0 : i32
    %c0_i32_1 = arith.constant 0 : i32
    return %c0_i32, %c0_i32_0 : i32, i32
  }
  func.func @transform_6(%arg0: i32) -> (i32, i32) {
    %c0_i32 = arith.constant 0 : i32
    %c0_i32_0 = arith.constant 0 : i32
    %c0_i32_1 = arith.constant 0 : i32
    return %c0_i32, %c0_i32_0 : i32, i32
  }
  func.func @transform_7(%arg0: i32) -> (i32, i32) {
    %c0_i32 = arith.constant 0 : i32
    %c0_i32_0 = arith.constant 0 : i32
    %c0_i32_1 = arith.constant 0 : i32
    return %c0_i32, %c0_i32_0 : i32, i32
  }
  func.func @transform_8(%arg0: i32) -> (i32, i32) {
    %c0_i32 = arith.constant 0 : i32
    %c0_i32_0 = arith.constant 0 : i32
    %c0_i32_1 = arith.constant 0 : i32
    return %c0_i32, %c0_i32_0 : i32, i32
  }
  func.func @transform_9(%arg0: i32) -> (i32, i32) {
    %c0_i32 = arith.constant 0 : i32
    %c0_i32_0 = arith.constant 0 : i32
    return %arg0, %c0_i32 : i32, i32
  }
}

</mosaic_0001>

<llo_original>
// kernel: tpu_custom_call.1
$region0: #{tpu_custom_call.1}
  #allocation0 [shape = 'u32[]', space=smem, size = 0x4, offset = 0x4, fixed_abs, tag = 'smem constant byte address 0x4 - core index']
  #allocation1 [shape = 'u32[144,128]{1,0:T(1,128)}', space=vmem, size = 0x12000, scoped, tag = 'internal scratch']
  %s0 = inlined_call_operand.hbm [shape: f32[8,64], index: 0, kind: input, shape index: {}]
  %s1 = inlined_call_operand.vmem [shape: bf16[64,128], index: 1, kind: input, shape index: {}]
  %s2 = inlined_call_operand.vmem [shape: f32[1,128], index: 2, kind: input, shape index: {}]
  %s3 = inlined_call_operand.vmem [shape: bf16[128,256], index: 3, kind: input, shape index: {}]
  %s4 = inlined_call_operand.vmem [shape: f32[1,256], index: 4, kind: input, shape index: {}]
  %s5 = inlined_call_operand.vmem [shape: bf16[256,64], index: 5, kind: input, shape index: {}]
  %s6 = inlined_call_operand.vmem [shape: f32[1,64], index: 6, kind: input, shape index: {}]
  %s7 = inlined_call_operand.vmem [shape: bf16[64,128], index: 7, kind: input, shape index: {}]
  %s8 = inlined_call_operand.vmem [shape: f32[1,128], index: 8, kind: input, shape index: {}]
  %s9 = inlined_call_operand.hbm [shape: f32[8,128], index: 9, kind: output, shape index: {}]
  %s10 = sld [smem:[#allocation0]]
  $region50: #{tpu_custom_call.1} parent=0
    _
  %s12 = ssub.s32 1, %s10
  %s13 = scalar_select 0, %s12, %s10
  $region1: #{tpu_custom_call.1} parent=0
    #allocation2 [shape = 'u8[4096]{0}', space=vmem, size = 0x1000, scoped, tag = 'input window, operand 0, single buffered']
    #allocation3 [shape = 's32[1]{0}', space=sflag, size = 0x4, scoped, tag = 'scoped memory for tpu_custom_call.1']
    #allocation4 [shape = 's32[1]{0}', space=sflag, size = 0x4, scoped, tag = 'scoped memory for tpu_custom_call.1']
    #allocation5 [shape = 'u8[4096]{0}', space=vmem, size = 0x1000, scoped, tag = 'output window, operand 0, single buffered']
    %14 = vsyncpa [#allocation3], 0
    %15 = vsyncpa [#allocation4], 0
    // Predicated region
    $region2: #{tpu_custom_call.1} parent=1 // pred_check
      _
    $region3: #{tpu_custom_call.1} parent=1 // pred_check_branch
      %17 = sbr.rel (0) target = $region5
    $region4: #{tpu_custom_call.1} parent=1 // pred_region
      %s19 = ssub.s32 128, 128
      %20 = vsyncadd [#allocation3], %s19
      %s22 = sshll.u32 [#allocation2], 4
      %s23 = int_to_ptr.vmem [resolvable:$true] %s22
      %25 = dma.hbm_to_vmem [thread:$0]  %s0, 128, %s23, [#allocation3]
    $region5: #{tpu_custom_call.1} parent=1 // pred_fallthru
      _
    // Predicated region
    $region6: #{tpu_custom_call.1} parent=1 // pred_check
      _
    $region7: #{tpu_custom_call.1} parent=1 // pred_check_branch
      %27 = sbr.rel (0) target = $region9
    $region8: #{tpu_custom_call.1} parent=1 // pred_region
      _
    $region9: #{tpu_custom_call.1} parent=1 // pred_fallthru
      _
    // Predicated region
    $region10: #{tpu_custom_call.1} parent=1 // pred_check
      _
    $region11: #{tpu_custom_call.1} parent=1 // pred_check_branch
      %29 = sbr.rel (0) target = $region13
    $region12: #{tpu_custom_call.1} parent=1 // pred_region
      _
    $region13: #{tpu_custom_call.1} parent=1 // pred_fallthru
      _
    // Predicated region
    $region14: #{tpu_custom_call.1} parent=1 // pred_check
      _
    $region15: #{tpu_custom_call.1} parent=1 // pred_check_branch
      %31 = sbr.rel (0) target = $region17
    $region16: #{tpu_custom_call.1} parent=1 // pred_region
      _
    $region17: #{tpu_custom_call.1} parent=1 // pred_fallthru
      _
    // Predicated region
    $region18: #{tpu_custom_call.1} parent=1 // pred_check
      _
    $region19: #{tpu_custom_call.1} parent=1 // pred_check_branch
      %33 = sbr.rel (0) target = $region21
    $region20: #{tpu_custom_call.1} parent=1 // pred_region
      _
    $region21: #{tpu_custom_call.1} parent=1 // pred_fallthru
      _
    // Predicated region
    $region22: #{tpu_custom_call.1} parent=1 // pred_check
      _
    $region23: #{tpu_custom_call.1} parent=1 // pred_check_branch
      %35 = sbr.rel (0) target = $region25
    $region24: #{tpu_custom_call.1} parent=1 // pred_region
      _
    $region25: #{tpu_custom_call.1} parent=1 // pred_fallthru
      _
    // Predicated region
    $region26: #{tpu_custom_call.1} parent=1 // pred_check
      _
    $region27: #{tpu_custom_call.1} parent=1 // pred_check_branch
      %37 = sbr.rel (0) target = $region29
    $region28: #{tpu_custom_call.1} parent=1 // pred_region
      _
    $region29: #{tpu_custom_call.1} parent=1 // pred_fallthru
      _
    // Predicated region
    $region30: #{tpu_custom_call.1} parent=1 // pred_check
      _
    $region31: #{tpu_custom_call.1} parent=1 // pred_check_branch
      %39 = sbr.rel (0) target = $region33
    $region32: #{tpu_custom_call.1} parent=1 // pred_region
      _
    $region33: #{tpu_custom_call.1} parent=1 // pred_fallthru
      _
    // Predicated region
    $region34: #{tpu_custom_call.1} parent=1 // pred_check
      _
    $region35: #{tpu_custom_call.1} parent=1 // pred_check_branch
      %41 = sbr.rel (0) target = $region37
    $region36: #{tpu_custom_call.1} parent=1 // pred_region
      _
    $region37: #{tpu_custom_call.1} parent=1 // pred_fallthru
      _
    // Predicated region
    $region38: #{tpu_custom_call.1} parent=1 // pred_check
      _
    $region39: #{tpu_custom_call.1} parent=1 // pred_check_branch
      %43 = sbr.rel (0) target = $region41
    $region40: #{tpu_custom_call.1} parent=1 // pred_region
      %44 = dma.done [#allocation3], 128
    $region41: #{tpu_custom_call.1} parent=1 // pred_fallthru
      _
    %v46 = vld [vmem:[#allocation2] sm:$0xff]
    %v47 = vpack.c.bf16 %v46, %v46
    %v48 = vld [vmem:[%s1] sm:$0xf]
    %v49 = vld [vmem:[%s1 + $0x4] sm:$0xf]
    %v50 = vld [vmem:[%s1 + $0x8] sm:$0xf]
    %v51 = vld [vmem:[%s1 + $0xc] sm:$0xf]
    %v52 = vld [vmem:[%s1 + $0x10] sm:$0xf]
    %v53 = vld [vmem:[%s1 + $0x14] sm:$0xf]
    %v54 = vld [vmem:[%s1 + $0x18] sm:$0xf]
    %v55 = vld [vmem:[%s1 + $0x1c] sm:$0xf]
    %v56 = vld [vmem:[%s2] sm:$0x1]
    %v58 = vlaneseq
    %v59 = vshrl.u32 %v58, 7
    %v60 = vsub.s32 0, %v59
    %v61 = vrot.slane %v56, %v60
    %v71 = vunpack.c.l.b16 %v48
    %v72 = vunpack.c.l.b16 %v49
    %v73 = vunpack.c.l.b16 %v50
    %v74 = vunpack.c.l.b16 %v51
    %v75 = vunpack.c.l.b16 %v52
    %v76 = vunpack.c.l.b16 %v53
    %v77 = vunpack.c.l.b16 %v54
    %v78 = vunpack.c.l.b16 %v55
    %v79 = vpack.c.b16 %v72, %v71
    %v80 = vpack.c.b16 %v74, %v73
    %v81 = vpack.c.b16 %v76, %v75
    %v82 = vpack.c.b16 %v78, %v77
    %vm87 = vcmask 523264
    %v89 = vsel %vm87, %v47, 0
    %91 = vmatprep.subr.bf16.mxu0 0
    %92 = vmatpush1.bf16.msra.mxu0 0
    %93 = vmatprep.subr.bf16.mxu0 0
    %94 = vmatpush1.bf16.msra.mxu0 0
    %95 = vmatprep.subr.bf16.mxu0 0
    %96 = vmatpush1.bf16.msra.mxu0 0
    %97 = vmatprep.subr.bf16.mxu0 0
    %98 = vmatpush1.bf16.msra.mxu0 0
    %99 = vmatprep.subr.bf16.mxu0 0
    %100 = vmatpush1.bf16.msra.mxu0 %v82
    %101 = vmatprep.subr.bf16.mxu0 0
    %102 = vmatpush1.bf16.msra.mxu0 %v81
    %103 = vmatprep.subr.bf16.mxu0 0
    %104 = vmatpush1.bf16.msra.mxu0 %v80
    %105 = vmatprep.subr.bf16.mxu0 0
    %106 = vmatpush1.bf16.msra.mxu0 %v79
    %107 = vmatprep.subr.bf16.mxu0 0
    %108 = vmatpush2.bf16.msra.mxu0 0
    %109 = vmatprep.subr.bf16.mxu0 0
    %110 = vmatpush2.bf16.msra.mxu0 0
    %111 = vmatprep.subr.bf16.mxu0 0
    %112 = vmatpush2.bf16.msra.mxu0 0
    %113 = vmatprep.subr.bf16.mxu0 0
    %114 = vmatpush2.bf16.msra.mxu0 0
    %115 = vmatprep.subr.bf16.mxu0 0
    %116 = vmatpush2.bf16.msra.mxu0 0
    %117 = vmatprep.subr.bf16.mxu0 0
    %118 = vmatpush2.bf16.msra.mxu0 0
    %119 = vmatprep.subr.bf16.mxu0 0
    %120 = vmatpush2.bf16.msra.mxu0 0
    %121 = vmatprep.subr.bf16.mxu0 0
    %122 = vmatpush2.bf16.msra.mxu0 0
    %123 = vmatprep.mubr.bf16.mxu0 0
    %124 = vmatmul.mubr.bf16.gmra.mxu0 %v89
    %v125 = vpop.f32.mrf.mxu0
    %v126 = vadd.f32 %v61, %v125
    %v127 = vpop.f32.mrf.mxu0
    %v128 = vpop.f32.mrf.mxu0
    %v129 = vpop.f32.mrf.mxu0
    %130 = vdwg.mxu0
    %v131 = vmax.f32 %v126, 0.0
    %v132 = vpack.c.bf16 %v131, %v131
    %v133 = vld [vmem:[%s3] sm:$0xff]
    %v134 = vld [vmem:[%s3 + $0x8] sm:$0xff]
    %v135 = vld [vmem:[%s3 + $0x10] sm:$0xff]
    %v136 = vld [vmem:[%s3 + $0x18] sm:$0xff]
    %v137 = vld [vmem:[%s3 + $0x20] sm:$0xff]
    %v138 = vld [vmem:[%s3 + $0x28] sm:$0xff]
    %v139 = vld [vmem:[%s3 + $0x30] sm:$0xff]
    %v140 = vld [vmem:[%s3 + $0x38] sm:$0xff]
    %v141 = vld [vmem:[%s3 + $0x40] sm:$0xff]
    %v142 = vld [vmem:[%s3 + $0x48] sm:$0xff]
    %v143 = vld [vmem:[%s3 + $0x50] sm:$0xff]
    %v144 = vld [vmem:[%s3 + $0x58] sm:$0xff]
    %v145 = vld [vmem:[%s3 + $0x60] sm:$0xff]
    %v146 = vld [vmem:[%s3 + $0x68] sm:$0xff]
    %v147 = vld [vmem:[%s3 + $0x70] sm:$0xff]
    %v148 = vld [vmem:[%s3 + $0x78] sm:$0xff]
    %v149 = vld [vmem:[%s4] sm:$0x3]
    %v151 = vlaneseq
    %v152 = vshrl.u32 %v151, 7
    %v153 = vsub.s32 0, %v152
    %v154 = vrot.slane %v149, %v153
    %v155 = vlaneseq
    %v156 = vshrl.u32 %v155, 7
    %v157 = vsub.s32 1, %v156
    %v158 = vrot.slane %v149, %v157
    %v177 = vunpack.c.l.b16 %v133
    %v178 = vunpack.c.h.b16 %v133
    %v179 = vunpack.c.l.b16 %v134
    %v180 = vunpack.c.h.b16 %v134
    %v181 = vunpack.c.l.b16 %v135
    %v182 = vunpack.c.h.b16 %v135
    %v183 = vunpack.c.l.b16 %v136
    %v184 = vunpack.c.h.b16 %v136
    %v185 = vunpack.c.l.b16 %v137
    %v186 = vunpack.c.h.b16 %v137
    %v187 = vunpack.c.l.b16 %v138
    %v188 = vunpack.c.h.b16 %v138
    %v189 = vunpack.c.l.b16 %v139
    %v190 = vunpack.c.h.b16 %v139
    %v191 = vunpack.c.l.b16 %v140
    %v192 = vunpack.c.h.b16 %v140
    %v193 = vunpack.c.l.b16 %v141
    %v194 = vunpack.c.h.b16 %v141
    %v195 = vunpack.c.l.b16 %v142
    %v196 = vunpack.c.h.b16 %v142
    %v197 = vunpack.c.l.b16 %v143
    %v198 = vunpack.c.h.b16 %v143
    %v199 = vunpack.c.l.b16 %v144
    %v200 = vunpack.c.h.b16 %v144
    %v201 = vunpack.c.l.b16 %v145
    %v202 = vunpack.c.h.b16 %v145
    %v203 = vunpack.c.l.b16 %v146
    %v204 = vunpack.c.h.b16 %v146
    %v205 = vunpack.c.l.b16 %v147
    %v206 = vunpack.c.h.b16 %v147
    %v207 = vunpack.c.l.b16 %v148
    %v208 = vunpack.c.h.b16 %v148
    %v209 = vpack.c.b16 %v179, %v177
    %v210 = vpack.c.b16 %v180, %v178
    %v211 = vpack.c.b16 %v183, %v181
    %v212 = vpack.c.b16 %v184, %v182
    %v213 = vpack.c.b16 %v187, %v185
    %v214 = vpack.c.b16 %v188, %v186
    %v215 = vpack.c.b16 %v191, %v189
    %v216 = vpack.c.b16 %v192, %v190
    %v217 = vpack.c.b16 %v195, %v193
    %v218 = vpack.c.b16 %v196, %v194
    %v219 = vpack.c.b16 %v199, %v197
    %v220 = vpack.c.b16 %v200, %v198
    %v221 = vpack.c.b16 %v203, %v201
    %v222 = vpack.c.b16 %v204, %v202
    %v223 = vpack.c.b16 %v207, %v205
    %v224 = vpack.c.b16 %v208, %v206
    %241 = vmatprep.subr.bf16.mxu0 %v224
    %242 = vmatpush1.bf16.msra.mxu0 %v223
    %243 = vmatprep.subr.bf16.mxu0 %v222
    %244 = vmatpush1.bf16.msra.mxu0 %v221
    %245 = vmatprep.subr.bf16.mxu0 %v220
    %246 = vmatpush1.bf16.msra.mxu0 %v219
    %247 = vmatprep.subr.bf16.mxu0 %v218
    %248 = vmatpush1.bf16.msra.mxu0 %v217
    %249 = vmatprep.subr.bf16.mxu0 %v216
    %250 = vmatpush1.bf16.msra.mxu0 %v215
    %251 = vmatprep.subr.bf16.mxu0 %v214
    %252 = vmatpush1.bf16.msra.mxu0 %v213
    %253 = vmatprep.subr.bf16.mxu0 %v212
    %254 = vmatpush1.bf16.msra.mxu0 %v211
    %255 = vmatprep.subr.bf16.mxu0 %v210
    %256 = vmatpush1.bf16.msra.mxu0 %v209
    %257 = vmatprep.subr.bf16.mxu0 0
    %258 = vmatpush2.bf16.msra.mxu0 0
    %259 = vmatprep.subr.bf16.mxu0 0
    %260 = vmatpush2.bf16.msra.mxu0 0
    %261 = vmatprep.subr.bf16.mxu0 0
    %262 = vmatpush2.bf16.msra.mxu0 0
    %263 = vmatprep.subr.bf16.mxu0 0
    %264 = vmatpush2.bf16.msra.mxu0 0
    %265 = vmatprep.subr.bf16.mxu0 0
    %266 = vmatpush2.bf16.msra.mxu0 0
    %267 = vmatprep.subr.bf16.mxu0 0
    %268 = vmatpush2.bf16.msra.mxu0 0
    %269 = vmatprep.subr.bf16.mxu0 0
    %270 = vmatpush2.bf16.msra.mxu0 0
    %271 = vmatprep.subr.bf16.mxu0 0
    %272 = vmatpush2.bf16.msra.mxu0 0
    %273 = vmatprep.mubr.bf16.mxu0 0
    %274 = vmatmul.mubr.bf16.gmra.mxu0 %v132
    %v275 = vpop.f32.mrf.mxu0
    %v276 = vadd.f32 %v154, %v275
    %v277 = vpop.f32.mrf.mxu0
    %v278 = vadd.f32 %v158, %v277
    %v279 = vpop.f32.mrf.mxu0
    %v280 = vpop.f32.mrf.mxu0
    %281 = vdwg.mxu0
    %v282 = vmax.f32 %v276, 0.0
    %v283 = vmax.f32 %v278, 0.0
    %v284 = vpack.c.bf16 %v282, %v282
    %v285 = vpack.c.bf16 %v283, %v283
    %v286 = vld [vmem:[%s5] sm:$0xf]
    %v287 = vld [vmem:[%s5 + $0x4] sm:$0xf]
    %v288 = vld [vmem:[%s5 + $0x8] sm:$0xf]
    %v289 = vld [vmem:[%s5 + $0xc] sm:$0xf]
    %v290 = vld [vmem:[%s5 + $0x10] sm:$0xf]
    %v291 = vld [vmem:[%s5 + $0x14] sm:$0xf]
    %v292 = vld [vmem:[%s5 + $0x18] sm:$0xf]
    %v293 = vld [vmem:[%s5 + $0x1c] sm:$0xf]
    %v294 = vld [vmem:[%s5 + $0x20] sm:$0xf]
    %v295 = vld [vmem:[%s5 + $0x24] sm:$0xf]
    %v296 = vld [vmem:[%s5 + $0x28] sm:$0xf]
    %v297 = vld [vmem:[%s5 + $0x2c] sm:$0xf]
    %v298 = vld [vmem:[%s5 + $0x30] sm:$0xf]
    %v299 = vld [vmem:[%s5 + $0x34] sm:$0xf]
    %v300 = vld [vmem:[%s5 + $0x38] sm:$0xf]
    %v301 = vld [vmem:[%s5 + $0x3c] sm:$0xf]
    %v302 = vld [vmem:[%s5 + $0x40] sm:$0xf]
    %v303 = vld [vmem:[%s5 + $0x44] sm:$0xf]
    %v304 = vld [vmem:[%s5 + $0x48] sm:$0xf]
    %v305 = vld [vmem:[%s5 + $0x4c] sm:$0xf]
    %v306 = vld [vmem:[%s5 + $0x50] sm:$0xf]
    %v307 = vld [vmem:[%s5 + $0x54] sm:$0xf]
    %v308 = vld [vmem:[%s5 + $0x58] sm:$0xf]
    %v309 = vld [vmem:[%s5 + $0x5c] sm:$0xf]
    %v310 = vld [vmem:[%s5 + $0x60] sm:$0xf]
    %v311 = vld [vmem:[%s5 + $0x64] sm:$0xf]
    %v312 = vld [vmem:[%s5 + $0x68] sm:$0xf]
    %v313 = vld [vmem:[%s5 + $0x6c] sm:$0xf]
    %v314 = vld [vmem:[%s5 + $0x70] sm:$0xf]
    %v315 = vld [vmem:[%s5 + $0x74] sm:$0xf]
    %v316 = vld [vmem:[%s5 + $0x78] sm:$0xf]
    %v317 = vld [vmem:[%s5 + $0x7c] sm:$0xf]
    %v318 = vld [vmem:[%s6] sm:$0x1]
    %v320 = vlaneseq
    %v321 = vshrl.u32 %v320, 7
    %v322 = vsub.s32 0, %v321
    %v323 = vrot.slane %v318, %v322
    %v357 = vunpack.c.l.b16 %v286
    %v358 = vunpack.c.l.b16 %v287
    %v359 = vunpack.c.l.b16 %v288
    %v360 = vunpack.c.l.b16 %v289
    %v361 = vunpack.c.l.b16 %v290
    %v362 = vunpack.c.l.b16 %v291
    %v363 = vunpack.c.l.b16 %v292
    %v364 = vunpack.c.l.b16 %v293
    %v365 = vunpack.c.l.b16 %v294
    %v366 = vunpack.c.l.b16 %v295
    %v367 = vunpack.c.l.b16 %v296
    %v368 = vunpack.c.l.b16 %v297
    %v369 = vunpack.c.l.b16 %v298
    %v370 = vunpack.c.l.b16 %v299
    %v371 = vunpack.c.l.b16 %v300
    %v372 = vunpack.c.l.b16 %v301
    %v373 = vunpack.c.l.b16 %v302
    %v374 = vunpack.c.l.b16 %v303
    %v375 = vunpack.c.l.b16 %v304
    %v376 = vunpack.c.l.b16 %v305
    %v377 = vunpack.c.l.b16 %v306
    %v378 = vunpack.c.l.b16 %v307
    %v379 = vunpack.c.l.b16 %v308
    %v380 = vunpack.c.l.b16 %v309
    %v381 = vunpack.c.l.b16 %v310
    %v382 = vunpack.c.l.b16 %v311
    %v383 = vunpack.c.l.b16 %v312
    %v384 = vunpack.c.l.b16 %v313
    %v385 = vunpack.c.l.b16 %v314
    %v386 = vunpack.c.l.b16 %v315
    %v387 = vunpack.c.l.b16 %v316
    %v388 = vunpack.c.l.b16 %v317
    %v389 = vpack.c.b16 %v358, %v357
    %v390 = vpack.c.b16 %v360, %v359
    %v391 = vpack.c.b16 %v362, %v361
    %v392 = vpack.c.b16 %v364, %v363
    %v393 = vpack.c.b16 %v366, %v365
    %v394 = vpack.c.b16 %v368, %v367
    %v395 = vpack.c.b16 %v370, %v369
    %v396 = vpack.c.b16 %v372, %v371
    %v397 = vpack.c.b16 %v374, %v373
    %v398 = vpack.c.b16 %v376, %v375
    %v399 = vpack.c.b16 %v378, %v377
    %v400 = vpack.c.b16 %v380, %v379
    %v401 = vpack.c.b16 %v382, %v381
    %v402 = vpack.c.b16 %v384, %v383
    %v403 = vpack.c.b16 %v386, %v385
    %v404 = vpack.c.b16 %v388, %v387
    %421 = vmatprep.subr.bf16.mxu0 0
    %422 = vmatpush1.bf16.msra.mxu0 %v396
    %423 = vmatprep.subr.bf16.mxu0 0
    %424 = vmatpush1.bf16.msra.mxu0 %v395
    %425 = vmatprep.subr.bf16.mxu0 0
    %426 = vmatpush1.bf16.msra.mxu0 %v394
    %427 = vmatprep.subr.bf16.mxu0 0
    %428 = vmatpush1.bf16.msra.mxu0 %v393
    %429 = vmatprep.subr.bf16.mxu0 0
    %430 = vmatpush1.bf16.msra.mxu0 %v392
    %431 = vmatprep.subr.bf16.mxu0 0
    %432 = vmatpush1.bf16.msra.mxu0 %v391
    %433 = vmatprep.subr.bf16.mxu0 0
    %434 = vmatpush1.bf16.msra.mxu0 %v390
    %435 = vmatprep.subr.bf16.mxu0 0
    %436 = vmatpush1.bf16.msra.mxu0 %v389
    %437 = vmatprep.subr.bf16.mxu0 0
    %438 = vmatpush2.bf16.msra.mxu0 %v404
    %439 = vmatprep.subr.bf16.mxu0 0
    %440 = vmatpush2.bf16.msra.mxu0 %v403
    %441 = vmatprep.subr.bf16.mxu0 0
    %442 = vmatpush2.bf16.msra.mxu0 %v402
    %443 = vmatprep.subr.bf16.mxu0 0
    %444 = vmatpush2.bf16.msra.mxu0 %v401
    %445 = vmatprep.subr.bf16.mxu0 0
    %446 = vmatpush2.bf16.msra.mxu0 %v400
    %447 = vmatprep.subr.bf16.mxu0 0
    %448 = vmatpush2.bf16.msra.mxu0 %v399
    %449 = vmatprep.subr.bf16.mxu0 0
    %450 = vmatpush2.bf16.msra.mxu0 %v398
    %451 = vmatprep.subr.bf16.mxu0 0
    %452 = vmatpush2.bf16.msra.mxu0 %v397
    %453 = vmatprep.mubr.bf16.mxu0 %v285
    %454 = vmatmul.mubr.bf16.gmra.mxu0 %v284
    %v455 = vpop.f32.mrf.mxu0
    %v456 = vadd.f32 %v323, %v455
    %v457 = vpop.f32.mrf.mxu0
    %v458 = vpop.f32.mrf.mxu0
    %v459 = vpop.f32.mrf.mxu0
    %460 = vdwg.mxu0
    %v461 = vmax.f32 %v456, 0.0
    %v462 = vpack.c.bf16 %v461, %v461
    %v463 = vld [vmem:[%s7] sm:$0xf]
    %v464 = vld [vmem:[%s7 + $0x4] sm:$0xf]
    %v465 = vld [vmem:[%s7 + $0x8] sm:$0xf]
    %v466 = vld [vmem:[%s7 + $0xc] sm:$0xf]
    %v467 = vld [vmem:[%s7 + $0x10] sm:$0xf]
    %v468 = vld [vmem:[%s7 + $0x14] sm:$0xf]
    %v469 = vld [vmem:[%s7 + $0x18] sm:$0xf]
    %v470 = vld [vmem:[%s7 + $0x1c] sm:$0xf]
    %v471 = vld [vmem:[%s8] sm:$0x1]
    %v473 = vlaneseq
    %v474 = vshrl.u32 %v473, 7
    %v475 = vsub.s32 0, %v474
    %v476 = vrot.slane %v471, %v475
    %v486 = vunpack.c.l.b16 %v463
    %v487 = vunpack.c.l.b16 %v464
    %v488 = vunpack.c.l.b16 %v465
    %v489 = vunpack.c.l.b16 %v466
    %v490 = vunpack.c.l.b16 %v467
    %v491 = vunpack.c.l.b16 %v468
    %v492 = vunpack.c.l.b16 %v469
    %v493 = vunpack.c.l.b16 %v470
    %v494 = vpack.c.b16 %v487, %v486
    %v495 = vpack.c.b16 %v489, %v488
    %v496 = vpack.c.b16 %v491, %v490
    %v497 = vpack.c.b16 %v493, %v492
    %v503 = vsel %vm87, %v462, 0
    %505 = vmatprep.subr.bf16.mxu0 0
    %506 = vmatpush1.bf16.msra.mxu0 0
    %507 = vmatprep.subr.bf16.mxu0 0
    %508 = vmatpush1.bf16.msra.mxu0 0
    %509 = vmatprep.subr.bf16.mxu0 0
    %510 = vmatpush1.bf16.msra.mxu0 0
    %511 = vmatprep.subr.bf16.mxu0 0
    %512 = vmatpush1.bf16.msra.mxu0 0
    %513 = vmatprep.subr.bf16.mxu0 0
    %514 = vmatpush1.bf16.msra.mxu0 %v497
    %515 = vmatprep.subr.bf16.mxu0 0
    %516 = vmatpush1.bf16.msra.mxu0 %v496
    %517 = vmatprep.subr.bf16.mxu0 0
    %518 = vmatpush1.bf16.msra.mxu0 %v495
    %519 = vmatprep.subr.bf16.mxu0 0
    %520 = vmatpush1.bf16.msra.mxu0 %v494
    %521 = vmatprep.subr.bf16.mxu0 0
    %522 = vmatpush2.bf16.msra.mxu0 0
    %523 = vmatprep.subr.bf16.mxu0 0
    %524 = vmatpush2.bf16.msra.mxu0 0
    %525 = vmatprep.subr.bf16.mxu0 0
    %526 = vmatpush2.bf16.msra.mxu0 0
    %527 = vmatprep.subr.bf16.mxu0 0
    %528 = vmatpush2.bf16.msra.mxu0 0
    %529 = vmatprep.subr.bf16.mxu0 0
    %530 = vmatpush2.bf16.msra.mxu0 0
    %531 = vmatprep.subr.bf16.mxu0 0
    %532 = vmatpush2.bf16.msra.mxu0 0
    %533 = vmatprep.subr.bf16.mxu0 0
    %534 = vmatpush2.bf16.msra.mxu0 0
    %535 = vmatprep.subr.bf16.mxu0 0
    %536 = vmatpush2.bf16.msra.mxu0 0
    %537 = vmatprep.mubr.bf16.mxu0 0
    %538 = vmatmul.mubr.bf16.gmra.mxu0 %v503
    %v539 = vpop.f32.mrf.mxu0
    %v540 = vadd.f32 %v476, %v539
    %v541 = vpop.f32.mrf.mxu0
    %v542 = vpop.f32.mrf.mxu0
    %v543 = vpop.f32.mrf.mxu0
    %544 = vdwg.mxu0
    %545 = vst [vmem:[#allocation5] sm:$0xff] %v540
    // Predicated region
    $region42: #{tpu_custom_call.1} parent=1 // pred_check
      _
    $region43: #{tpu_custom_call.1} parent=1 // pred_check_branch
      %547 = sbr.rel (0) target = $region45
    $region44: #{tpu_custom_call.1} parent=1 // pred_region
      %s549 = ssub.s32 128, 128
      %550 = vsyncadd [#allocation4], %s549
      %s552 = sshll.u32 [#allocation5], 4
      %s553 = int_to_ptr.vmem [resolvable:$true] %s552
      %555 = dma.vmem_to_hbm [thread:$0]  %s553, 128, %s9, [#allocation4]
    $region45: #{tpu_custom_call.1} parent=1 // pred_fallthru
      _
    // Predicated region
    $region46: #{tpu_custom_call.1} parent=1 // pred_check
      _
    $region47: #{tpu_custom_call.1} parent=1 // pred_check_branch
      %557 = sbr.rel (0) target = $region49
    $region48: #{tpu_custom_call.1} parent=1 // pred_region
      %558 = dma.done [#allocation4], 128
    $region49: #{tpu_custom_call.1} parent=1 // pred_fallthru
      _
    %559 = vsyncpa [#allocation3], 1
    %560 = vsyncpa [#allocation4], 1

</llo_original>
